<compile_context>
chip_gen: v5e
topology: v5e:2x2
jax: 0.10.0
libtpu: 0.0.40
codegen_flags: <defaults>
</compile_context>

<pallas_src>
import functools

import jax
import jax.numpy as jnp
from jax.experimental import pallas as pl
from jax.experimental.pallas import tpu as pltpu

LANE = 128
SUBLANE = 8


def _round_up(n, m):
    return (n + m - 1) // m * m


def _lora_linear_kernel(x_ref, w_ref, b_ref, a_ref, bb_ref, o_ref, *, alpha):
    # x_ref:  (TB, in_pad)      bf16
    # w_ref:  (in_pad, out_pad) bf16
    # b_ref:  (1, out_pad)      f32
    # a_ref:  (in_pad, r_pad)   bf16
    # bb_ref: (r_pad, out_pad)  bf16
    # o_ref:  (TB, out_pad)     f32   (lane-dense, unmasked stores)
    x = x_ref[...]
    base = jnp.dot(x, w_ref[...], preferred_element_type=jnp.float32)
    xa = jnp.dot(x, a_ref[...], preferred_element_type=jnp.float32)
    lora = jnp.dot(xa.astype(bb_ref.dtype), bb_ref[...],
                   preferred_element_type=jnp.float32)
    o_ref[...] = (base + b_ref[...] + alpha * lora).astype(o_ref.dtype)


@functools.partial(jax.jit, static_argnames=("alpha",))
def linear_with_lora_forward(x, w, b, a, bmat, *, alpha):
    """Fused LinearWithLoRA forward: x @ W + b + alpha * (x @ A @ B)."""
    batch, in_dim = x.shape
    out_dim = w.shape[1]
    rank = a.shape[1]

    in_p = _round_up(in_dim, LANE)
    out_p = _round_up(out_dim, LANE)
    r_p = _round_up(rank, LANE)

    # Batch tiling: single block for small batches, 256-row tiles otherwise so
    # MXU rows fill up while weights stay resident across grid steps.
    tb = 256 if batch >= 256 else _round_up(batch, SUBLANE)
    batch_p = _round_up(batch, tb)

    cdt = jnp.bfloat16  # MXU operand dtype (f32 accumulation in-kernel)

    xp = jnp.zeros((batch_p, in_p), cdt).at[:batch, :in_dim].set(x.astype(cdt))
    wp = jnp.zeros((in_p, out_p), cdt).at[:in_dim, :out_dim].set(w.astype(cdt))
    bp = jnp.zeros((1, out_p), jnp.float32).at[:, :out_dim].set(
        b.reshape(1, -1).astype(jnp.float32))
    ap = jnp.zeros((in_p, r_p), cdt).at[:in_dim, :rank].set(a.astype(cdt))
    bbp = jnp.zeros((r_p, out_p), cdt).at[:rank, :out_dim].set(bmat.astype(cdt))

    grid = (batch_p // tb,)

    flops = 2 * batch_p * (in_p * out_p + in_p * r_p + r_p * out_p)
    bytes_accessed = (
        xp.size * 2 + wp.size * 2 + ap.size * 2 + bbp.size * 2
        + bp.size * 4 + batch_p * out_p * 4)

    out = pl.pallas_call(
        functools.partial(_lora_linear_kernel, alpha=float(alpha)),
        out_shape=jax.ShapeDtypeStruct((batch_p, out_p), jnp.float32),
        grid=grid,
        in_specs=[
            pl.BlockSpec((tb, in_p), lambda i: (i, 0)),      # x: tiled over batch
            pl.BlockSpec((in_p, out_p), lambda i: (0, 0)),   # W: VMEM-resident
            pl.BlockSpec((1, out_p), lambda i: (0, 0)),      # b
            pl.BlockSpec((in_p, r_p), lambda i: (0, 0)),     # A
            pl.BlockSpec((r_p, out_p), lambda i: (0, 0)),    # B
        ],
        out_specs=pl.BlockSpec((tb, out_p), lambda i: (i, 0)),
        compiler_params=pltpu.CompilerParams(
            dimension_semantics=("parallel",)),
        cost_estimate=pl.CostEstimate(
            flops=int(flops), transcendentals=0,
            bytes_accessed=int(bytes_accessed)),
    )(xp, wp, bp, ap, bbp)

    return out[:batch, :out_dim]


def _ref_f32(x, w, b, a, bmat, alpha):
    hi = jax.lax.Precision.HIGHEST
    base = jnp.dot(x, w, precision=hi) + b.reshape(1, -1)
    lora = jnp.dot(jnp.dot(x, a, precision=hi), bmat, precision=hi)
    return base + alpha * lora


def _ref_bf16_aware(x, w, b, a, bmat, alpha):
    """Reference that applies the same bf16 operand rounding as the kernel."""
    hi = jax.lax.Precision.HIGHEST
    q = lambda t: t.astype(jnp.bfloat16).astype(jnp.float32)
    base = jnp.dot(q(x), q(w), precision=hi) + b.reshape(1, -1)
    xa = q(jnp.dot(q(x), q(a), precision=hi))
    lora = jnp.dot(xa, q(bmat), precision=hi)
    return base + alpha * lora


if __name__ == "__main__":
    # Small LinearWithLoRA config: Linear(784 -> 10), rank=8, alpha=2.0, batch=8.
    in_features, out_features, rank, alpha = 784, 10, 8, 2.0
    batch = 8

    key = jax.random.PRNGKey(0)
    kx, kw, kb, ka, kB = jax.random.split(key, 5)

    bound = 1.0 / (in_features ** 0.5)
    x = jax.random.normal(kx, (batch, in_features), jnp.float32)
    # nn.Linear default init, weight stored as [in, out].
    w = jax.random.uniform(kw, (in_features, out_features), jnp.float32, -bound, bound)
    b = jax.random.uniform(kb, (out_features,), jnp.float32, -bound, bound)
    # LoRALayer init: A = rand(in, rank) / sqrt(rank).  PyTorch inits B to zeros
    # (so LoRA starts inactive); use small nonzero values here so the low-rank
    # path is actually exercised by the self-test.
    std_dev = 1.0 / (rank ** 0.5)
    a = jax.random.uniform(ka, (in_features, rank), jnp.float32, 0.0, std_dev)
    bmat = jax.random.uniform(kB, (rank, out_features), jnp.float32, -0.1, 0.1)

    out = linear_with_lora_forward(x, w, b, a, bmat, alpha=alpha)
    out = jax.block_until_ready(out)

    assert out.shape == (batch, out_features), out.shape
    # Tight check against a reference using the same bf16 operand rounding.
    ref_q = _ref_bf16_aware(x, w, b, a, bmat, alpha)
    assert jnp.allclose(out, ref_q, atol=2e-3, rtol=2e-3), "mismatch vs bf16-aware reference"
    # Loose sanity check against the exact f32 reference (bf16 operand error).
    ref = _ref_f32(x, w, b, a, bmat, alpha)
    assert jnp.allclose(out, ref, atol=1e-1, rtol=1e-1), "mismatch vs f32 reference"

    print("KERNEL_OK")
</pallas_src>

<mosaic_0001>
module attributes {stable_mosaic.version = 11 : i64} {
  func.func @_lora_linear_kernel(%arg0: i32, %arg1: memref<8x896xbf16, #tpu.memory_space<vmem>>, %arg2: memref<896x128xbf16, #tpu.memory_space<vmem>>, %arg3: memref<1x128xf32, #tpu.memory_space<vmem>>, %arg4: memref<896x128xbf16, #tpu.memory_space<vmem>>, %arg5: memref<128x128xbf16, #tpu.memory_space<vmem>>, %arg6: memref<8x128xf32, #tpu.memory_space<vmem>>) attributes {dimension_semantics = [#tpu.dimension_semantics<parallel>], iteration_bounds = array<i64: 1>, scalar_prefetch = 0 : i64, scratch_operands = 0 : i64, tpu.core_type = #tpu.core_type<tc>, window_params = [{transform_indices = @transform_0, window_bounds = array<i64: 8, 896>}, {pipeline_mode = #tpu.pipeline_mode<synchronous>, transform_indices = @transform_1, window_bounds = array<i64: 896, 128>}, {pipeline_mode = #tpu.pipeline_mode<synchronous>, transform_indices = @transform_2, window_bounds = array<i64: 1, 128>}, {pipeline_mode = #tpu.pipeline_mode<synchronous>, transform_indices = @transform_3, window_bounds = array<i64: 896, 128>}, {pipeline_mode = #tpu.pipeline_mode<synchronous>, transform_indices = @transform_4, window_bounds = array<i64: 128, 128>}, {transform_indices = @transform_5, window_bounds = array<i64: 8, 128>}]} {
    %c0 = arith.constant 0 : index
    %c0_0 = arith.constant 0 : index
    %0 = vector.load %arg1[%c0, %c0_0] : memref<8x896xbf16, #tpu.memory_space<vmem>>, vector<8x896xbf16>
    %c0_1 = arith.constant 0 : index
    %c0_2 = arith.constant 0 : index
    %1 = vector.load %arg2[%c0_1, %c0_2] : memref<896x128xbf16, #tpu.memory_space<vmem>>, vector<896x128xbf16>
    %cst = arith.constant dense<0.000000e+00> : vector<8x128xf32>
    %2 = tpu.matmul %0, %1, %cst {dimension_numbers = #tpu.dot_dimension_numbers<[1], [0], [0], [1], [0, 0, 1, 1], [], []>} : vector<8x896xbf16>, vector<896x128xbf16>, vector<8x128xf32> -> vector<8x128xf32>
    %c0_3 = arith.constant 0 : index
    %c0_4 = arith.constant 0 : index
    %3 = vector.load %arg4[%c0_3, %c0_4] : memref<896x128xbf16, #tpu.memory_space<vmem>>, vector<896x128xbf16>
    %cst_5 = arith.constant dense<0.000000e+00> : vector<8x128xf32>
    %4 = tpu.matmul %0, %3, %cst_5 {dimension_numbers = #tpu.dot_dimension_numbers<[1], [0], [0], [1], [0, 0, 1, 1], [], []>} : vector<8x896xbf16>, vector<896x128xbf16>, vector<8x128xf32> -> vector<8x128xf32>
    %5 = arith.truncf %4 : vector<8x128xf32> to vector<8x128xbf16>
    %c0_6 = arith.constant 0 : index
    %c0_7 = arith.constant 0 : index
    %6 = vector.load %arg5[%c0_6, %c0_7] : memref<128x128xbf16, #tpu.memory_space<vmem>>, vector<128x128xbf16>
    %cst_8 = arith.constant dense<0.000000e+00> : vector<8x128xf32>
    %7 = tpu.matmul %5, %6, %cst_8 {dimension_numbers = #tpu.dot_dimension_numbers<[1], [0], [0], [1], [0, 0, 1, 1], [], []>} : vector<8x128xbf16>, vector<128x128xbf16>, vector<8x128xf32> -> vector<8x128xf32>
    %c0_9 = arith.constant 0 : index
    %c0_10 = arith.constant 0 : index
    %8 = vector.load %arg3[%c0_9, %c0_10] : memref<1x128xf32, #tpu.memory_space<vmem>>, vector<1x128xf32>
    %9 = vector.broadcast %8 : vector<1x128xf32> to vector<8x128xf32>
    %10 = arith.addf %2, %9 : vector<8x128xf32>
    %cst_11 = arith.constant 2.000000e+00 : f32
    %11 = vector.broadcast %cst_11 : f32 to vector<8x128xf32>
    %12 = arith.mulf %11, %7 : vector<8x128xf32>
    %13 = arith.addf %10, %12 : vector<8x128xf32>
    %c0_12 = arith.constant 0 : index
    %c0_13 = arith.constant 0 : index
    %14 = vector.load %arg6[%c0_12, %c0_13] : memref<8x128xf32, #tpu.memory_space<vmem>>, vector<8x128xf32>
    tpu.vector_store %arg6[%c0_12, %c0_13], %13 {strides = array<i32>} : memref<8x128xf32, #tpu.memory_space<vmem>>, vector<8x128xf32>,
    return
  }
  func.func @transform_0(%arg0: i32) -> (i32, i32) {
    %c0_i32 = arith.constant 0 : i32
    %c0_i32_0 = arith.constant 0 : i32
    return %arg0, %c0_i32 : i32, i32
  }
  func.func @transform_1(%arg0: i32) -> (i32, i32) {
    %c0_i32 = arith.constant 0 : i32
    %c0_i32_0 = arith.constant 0 : i32
    %c0_i32_1 = arith.constant 0 : i32
    return %c0_i32, %c0_i32_0 : i32, i32
  }
  func.func @transform_2(%arg0: i32) -> (i32, i32) {
    %c0_i32 = arith.constant 0 : i32
    %c0_i32_0 = arith.constant 0 : i32
    %c0_i32_1 = arith.constant 0 : i32
    return %c0_i32, %c0_i32_0 : i32, i32
  }
  func.func @transform_3(%arg0: i32) -> (i32, i32) {
    %c0_i32 = arith.constant 0 : i32
    %c0_i32_0 = arith.constant 0 : i32
    %c0_i32_1 = arith.constant 0 : i32
    return %c0_i32, %c0_i32_0 : i32, i32
  }
  func.func @transform_4(%arg0: i32) -> (i32, i32) {
    %c0_i32 = arith.constant 0 : i32
    %c0_i32_0 = arith.constant 0 : i32
    %c0_i32_1 = arith.constant 0 : i32
    return %c0_i32, %c0_i32_0 : i32, i32
  }
  func.func @transform_5(%arg0: i32) -> (i32, i32) {
    %c0_i32 = arith.constant 0 : i32
    %c0_i32_0 = arith.constant 0 : i32
    return %arg0, %c0_i32 : i32, i32
  }
}

</mosaic_0001>

<llo_original>
// kernel: linear_with_lora_forward.1
$region0: #{linear_with_lora_forward.1}
  #allocation0 [shape = 'u32[]', space=smem, size = 0x4, offset = 0x4, fixed_abs, tag = 'smem constant byte address 0x4 - core index']
  #allocation1 [shape = 'u32[72,128]{1,0:T(1,128)}', space=vmem, size = 0x9000, scoped, tag = 'internal scratch']
  %s0 = inlined_call_operand.vmem [shape: bf16[8,896], index: 0, kind: input, shape index: {}]
  %s1 = inlined_call_operand.vmem [shape: bf16[896,128], index: 1, kind: input, shape index: {}]
  %s2 = inlined_call_operand.vmem [shape: f32[1,128], index: 2, kind: input, shape index: {}]
  %s3 = inlined_call_operand.vmem [shape: bf16[896,128], index: 3, kind: input, shape index: {}]
  %s4 = inlined_call_operand.vmem [shape: bf16[128,128], index: 4, kind: input, shape index: {}]
  %s5 = inlined_call_operand.hbm [shape: f32[8,128], index: 5, kind: output, shape index: {}]
  %s6 = sld [smem:[#allocation0]]
  $region30: #{linear_with_lora_forward.1} parent=0
    _
  %s8 = ssub.s32 1, %s6
  %s9 = scalar_select 0, %s8, %s6
  $region1: #{linear_with_lora_forward.1} parent=0
    #allocation2 [shape = 'u8[4096]{0}', space=vmem, size = 0x1000, scoped, tag = 'output window, operand 0, single buffered']
    #allocation3 [shape = 's32[1]{0}', space=sflag, size = 0x4, scoped, tag = 'scoped memory for linear_with_lora_forward.1']
    %10 = vsyncpa [#allocation3], 0
    // Predicated region
    $region2: #{linear_with_lora_forward.1} parent=1 // pred_check
      _
    $region3: #{linear_with_lora_forward.1} parent=1 // pred_check_branch
      %12 = sbr.rel (0) target = $region5
    $region4: #{linear_with_lora_forward.1} parent=1 // pred_region
      _
    $region5: #{linear_with_lora_forward.1} parent=1 // pred_fallthru
      _
    // Predicated region
    $region6: #{linear_with_lora_forward.1} parent=1 // pred_check
      _
    $region7: #{linear_with_lora_forward.1} parent=1 // pred_check_branch
      %14 = sbr.rel (0) target = $region9
    $region8: #{linear_with_lora_forward.1} parent=1 // pred_region
      _
    $region9: #{linear_with_lora_forward.1} parent=1 // pred_fallthru
      _
    // Predicated region
    $region10: #{linear_with_lora_forward.1} parent=1 // pred_check
      _
    $region11: #{linear_with_lora_forward.1} parent=1 // pred_check_branch
      %16 = sbr.rel (0) target = $region13
    $region12: #{linear_with_lora_forward.1} parent=1 // pred_region
      _
    $region13: #{linear_with_lora_forward.1} parent=1 // pred_fallthru
      _
    // Predicated region
    $region14: #{linear_with_lora_forward.1} parent=1 // pred_check
      _
    $region15: #{linear_with_lora_forward.1} parent=1 // pred_check_branch
      %18 = sbr.rel (0) target = $region17
    $region16: #{linear_with_lora_forward.1} parent=1 // pred_region
      _
    $region17: #{linear_with_lora_forward.1} parent=1 // pred_fallthru
      _
    // Predicated region
    $region18: #{linear_with_lora_forward.1} parent=1 // pred_check
      _
    $region19: #{linear_with_lora_forward.1} parent=1 // pred_check_branch
      %20 = sbr.rel (0) target = $region21
    $region20: #{linear_with_lora_forward.1} parent=1 // pred_region
      _
    $region21: #{linear_with_lora_forward.1} parent=1 // pred_fallthru
      _
    %v21 = vld [vmem:[%s0] sm:$0xff]
    %v22 = vld [vmem:[%s0 + $0x8] sm:$0xff]
    %v23 = vld [vmem:[%s0 + $0x10] sm:$0xff]
    %v24 = vld [vmem:[%s0 + $0x18] sm:$0xf]
    %v25 = vld [vmem:[%s1] sm:$0xf]
    %v26 = vld [vmem:[%s1 + $0x4] sm:$0xf]
    %v27 = vld [vmem:[%s1 + $0x8] sm:$0xf]
    %v28 = vld [vmem:[%s1 + $0xc] sm:$0xf]
    %v29 = vld [vmem:[%s1 + $0x10] sm:$0xf]
    %v30 = vld [vmem:[%s1 + $0x14] sm:$0xf]
    %v31 = vld [vmem:[%s1 + $0x18] sm:$0xf]
    %v32 = vld [vmem:[%s1 + $0x1c] sm:$0xf]
    %v33 = vld [vmem:[%s1 + $0x20] sm:$0xf]
    %v34 = vld [vmem:[%s1 + $0x24] sm:$0xf]
    %v35 = vld [vmem:[%s1 + $0x28] sm:$0xf]
    %v36 = vld [vmem:[%s1 + $0x2c] sm:$0xf]
    %v37 = vld [vmem:[%s1 + $0x30] sm:$0xf]
    %v38 = vld [vmem:[%s1 + $0x34] sm:$0xf]
    %v39 = vld [vmem:[%s1 + $0x38] sm:$0xf]
    %v40 = vld [vmem:[%s1 + $0x3c] sm:$0xf]
    %v41 = vld [vmem:[%s1 + $0x40] sm:$0xf]
    %v42 = vld [vmem:[%s1 + $0x44] sm:$0xf]
    %v43 = vld [vmem:[%s1 + $0x48] sm:$0xf]
    %v44 = vld [vmem:[%s1 + $0x4c] sm:$0xf]
    %v45 = vld [vmem:[%s1 + $0x50] sm:$0xf]
    %v46 = vld [vmem:[%s1 + $0x54] sm:$0xf]
    %v47 = vld [vmem:[%s1 + $0x58] sm:$0xf]
    %v48 = vld [vmem:[%s1 + $0x5c] sm:$0xf]
    %v49 = vld [vmem:[%s1 + $0x60] sm:$0xf]
    %v50 = vld [vmem:[%s1 + $0x64] sm:$0xf]
    %v51 = vld [vmem:[%s1 + $0x68] sm:$0xf]
    %v52 = vld [vmem:[%s1 + $0x6c] sm:$0xf]
    %v53 = vld [vmem:[%s1 + $0x70] sm:$0xf]
    %v54 = vld [vmem:[%s1 + $0x74] sm:$0xf]
    %v55 = vld [vmem:[%s1 + $0x78] sm:$0xf]
    %v56 = vld [vmem:[%s1 + $0x7c] sm:$0xf]
    %v57 = vld [vmem:[%s1 + $0x80] sm:$0xf]
    %v58 = vld [vmem:[%s1 + $0x84] sm:$0xf]
    %v59 = vld [vmem:[%s1 + $0x88] sm:$0xf]
    %v60 = vld [vmem:[%s1 + $0x8c] sm:$0xf]
    %v61 = vld [vmem:[%s1 + $0x90] sm:$0xf]
    %v62 = vld [vmem:[%s1 + $0x94] sm:$0xf]
    %v63 = vld [vmem:[%s1 + $0x98] sm:$0xf]
    %v64 = vld [vmem:[%s1 + $0x9c] sm:$0xf]
    %v65 = vld [vmem:[%s1 + $0xa0] sm:$0xf]
    %v66 = vld [vmem:[%s1 + $0xa4] sm:$0xf]
    %v67 = vld [vmem:[%s1 + $0xa8] sm:$0xf]
    %v68 = vld [vmem:[%s1 + $0xac] sm:$0xf]
    %v69 = vld [vmem:[%s1 + $0xb0] sm:$0xf]
    %v70 = vld [vmem:[%s1 + $0xb4] sm:$0xf]
    %v71 = vld [vmem:[%s1 + $0xb8] sm:$0xf]
    %v72 = vld [vmem:[%s1 + $0xbc] sm:$0xf]
    %v73 = vld [vmem:[%s1 + $0xc0] sm:$0xf]
    %v74 = vld [vmem:[%s1 + $0xc4] sm:$0xf]
    %v75 = vld [vmem:[%s1 + $0xc8] sm:$0xf]
    %v76 = vld [vmem:[%s1 + $0xcc] sm:$0xf]
    %v77 = vld [vmem:[%s1 + $0xd0] sm:$0xf]
    %v78 = vld [vmem:[%s1 + $0xd4] sm:$0xf]
    %v79 = vld [vmem:[%s1 + $0xd8] sm:$0xf]
    %v80 = vld [vmem:[%s1 + $0xdc] sm:$0xf]
    %v81 = vld [vmem:[%s1 + $0xe0] sm:$0xf]
    %v82 = vld [vmem:[%s1 + $0xe4] sm:$0xf]
    %v83 = vld [vmem:[%s1 + $0xe8] sm:$0xf]
    %v84 = vld [vmem:[%s1 + $0xec] sm:$0xf]
    %v85 = vld [vmem:[%s1 + $0xf0] sm:$0xf]
    %v86 = vld [vmem:[%s1 + $0xf4] sm:$0xf]
    %v87 = vld [vmem:[%s1 + $0xf8] sm:$0xf]
    %v88 = vld [vmem:[%s1 + $0xfc] sm:$0xf]
    %v89 = vld [vmem:[%s1 + $0x100] sm:$0xf]
    %v90 = vld [vmem:[%s1 + $0x104] sm:$0xf]
    %v91 = vld [vmem:[%s1 + $0x108] sm:$0xf]
    %v92 = vld [vmem:[%s1 + $0x10c] sm:$0xf]
    %v93 = vld [vmem:[%s1 + $0x110] sm:$0xf]
    %v94 = vld [vmem:[%s1 + $0x114] sm:$0xf]
    %v95 = vld [vmem:[%s1 + $0x118] sm:$0xf]
    %v96 = vld [vmem:[%s1 + $0x11c] sm:$0xf]
    %v97 = vld [vmem:[%s1 + $0x120] sm:$0xf]
    %v98 = vld [vmem:[%s1 + $0x124] sm:$0xf]
    %v99 = vld [vmem:[%s1 + $0x128] sm:$0xf]
    %v100 = vld [vmem:[%s1 + $0x12c] sm:$0xf]
    %v101 = vld [vmem:[%s1 + $0x130] sm:$0xf]
    %v102 = vld [vmem:[%s1 + $0x134] sm:$0xf]
    %v103 = vld [vmem:[%s1 + $0x138] sm:$0xf]
    %v104 = vld [vmem:[%s1 + $0x13c] sm:$0xf]
    %v105 = vld [vmem:[%s1 + $0x140] sm:$0xf]
    %v106 = vld [vmem:[%s1 + $0x144] sm:$0xf]
    %v107 = vld [vmem:[%s1 + $0x148] sm:$0xf]
    %v108 = vld [vmem:[%s1 + $0x14c] sm:$0xf]
    %v109 = vld [vmem:[%s1 + $0x150] sm:$0xf]
    %v110 = vld [vmem:[%s1 + $0x154] sm:$0xf]
    %v111 = vld [vmem:[%s1 + $0x158] sm:$0xf]
    %v112 = vld [vmem:[%s1 + $0x15c] sm:$0xf]
    %v113 = vld [vmem:[%s1 + $0x160] sm:$0xf]
    %v114 = vld [vmem:[%s1 + $0x164] sm:$0xf]
    %v115 = vld [vmem:[%s1 + $0x168] sm:$0xf]
    %v116 = vld [vmem:[%s1 + $0x16c] sm:$0xf]
    %v117 = vld [vmem:[%s1 + $0x170] sm:$0xf]
    %v118 = vld [vmem:[%s1 + $0x174] sm:$0xf]
    %v119 = vld [vmem:[%s1 + $0x178] sm:$0xf]
    %v120 = vld [vmem:[%s1 + $0x17c] sm:$0xf]
    %v121 = vld [vmem:[%s1 + $0x180] sm:$0xf]
    %v122 = vld [vmem:[%s1 + $0x184] sm:$0xf]
    %v123 = vld [vmem:[%s1 + $0x188] sm:$0xf]
    %v124 = vld [vmem:[%s1 + $0x18c] sm:$0xf]
    %v125 = vld [vmem:[%s1 + $0x190] sm:$0xf]
    %v126 = vld [vmem:[%s1 + $0x194] sm:$0xf]
    %v127 = vld [vmem:[%s1 + $0x198] sm:$0xf]
    %v128 = vld [vmem:[%s1 + $0x19c] sm:$0xf]
    %v129 = vld [vmem:[%s1 + $0x1a0] sm:$0xf]
    %v130 = vld [vmem:[%s1 + $0x1a4] sm:$0xf]
    %v131 = vld [vmem:[%s1 + $0x1a8] sm:$0xf]
    %v132 = vld [vmem:[%s1 + $0x1ac] sm:$0xf]
    %v133 = vld [vmem:[%s1 + $0x1b0] sm:$0xf]
    %v134 = vld [vmem:[%s1 + $0x1b4] sm:$0xf]
    %v135 = vld [vmem:[%s1 + $0x1b8] sm:$0xf]
    %v136 = vld [vmem:[%s1 + $0x1bc] sm:$0xf]
    %v137 = vld [vmem:[%s3] sm:$0xf]
    %v138 = vld [vmem:[%s3 + $0x4] sm:$0xf]
    %v139 = vld [vmem:[%s3 + $0x8] sm:$0xf]
    %v140 = vld [vmem:[%s3 + $0xc] sm:$0xf]
    %v141 = vld [vmem:[%s3 + $0x10] sm:$0xf]
    %v142 = vld [vmem:[%s3 + $0x14] sm:$0xf]
    %v143 = vld [vmem:[%s3 + $0x18] sm:$0xf]
    %v144 = vld [vmem:[%s3 + $0x1c] sm:$0xf]
    %v145 = vld [vmem:[%s3 + $0x20] sm:$0xf]
    %v146 = vld [vmem:[%s3 + $0x24] sm:$0xf]
    %v147 = vld [vmem:[%s3 + $0x28] sm:$0xf]
    %v148 = vld [vmem:[%s3 + $0x2c] sm:$0xf]
    %v149 = vld [vmem:[%s3 + $0x30] sm:$0xf]
    %v150 = vld [vmem:[%s3 + $0x34] sm:$0xf]
    %v151 = vld [vmem:[%s3 + $0x38] sm:$0xf]
    %v152 = vld [vmem:[%s3 + $0x3c] sm:$0xf]
    %v153 = vld [vmem:[%s3 + $0x40] sm:$0xf]
    %v154 = vld [vmem:[%s3 + $0x44] sm:$0xf]
    %v155 = vld [vmem:[%s3 + $0x48] sm:$0xf]
    %v156 = vld [vmem:[%s3 + $0x4c] sm:$0xf]
    %v157 = vld [vmem:[%s3 + $0x50] sm:$0xf]
    %v158 = vld [vmem:[%s3 + $0x54] sm:$0xf]
    %v159 = vld [vmem:[%s3 + $0x58] sm:$0xf]
    %v160 = vld [vmem:[%s3 + $0x5c] sm:$0xf]
    %v161 = vld [vmem:[%s3 + $0x60] sm:$0xf]
    %v162 = vld [vmem:[%s3 + $0x64] sm:$0xf]
    %v163 = vld [vmem:[%s3 + $0x68] sm:$0xf]
    %v164 = vld [vmem:[%s3 + $0x6c] sm:$0xf]
    %v165 = vld [vmem:[%s3 + $0x70] sm:$0xf]
    %v166 = vld [vmem:[%s3 + $0x74] sm:$0xf]
    %v167 = vld [vmem:[%s3 + $0x78] sm:$0xf]
    %v168 = vld [vmem:[%s3 + $0x7c] sm:$0xf]
    %v169 = vld [vmem:[%s3 + $0x80] sm:$0xf]
    %v170 = vld [vmem:[%s3 + $0x84] sm:$0xf]
    %v171 = vld [vmem:[%s3 + $0x88] sm:$0xf]
    %v172 = vld [vmem:[%s3 + $0x8c] sm:$0xf]
    %v173 = vld [vmem:[%s3 + $0x90] sm:$0xf]
    %v174 = vld [vmem:[%s3 + $0x94] sm:$0xf]
    %v175 = vld [vmem:[%s3 + $0x98] sm:$0xf]
    %v176 = vld [vmem:[%s3 + $0x9c] sm:$0xf]
    %v177 = vld [vmem:[%s3 + $0xa0] sm:$0xf]
    %v178 = vld [vmem:[%s3 + $0xa4] sm:$0xf]
    %v179 = vld [vmem:[%s3 + $0xa8] sm:$0xf]
    %v180 = vld [vmem:[%s3 + $0xac] sm:$0xf]
    %v181 = vld [vmem:[%s3 + $0xb0] sm:$0xf]
    %v182 = vld [vmem:[%s3 + $0xb4] sm:$0xf]
    %v183 = vld [vmem:[%s3 + $0xb8] sm:$0xf]
    %v184 = vld [vmem:[%s3 + $0xbc] sm:$0xf]
    %v185 = vld [vmem:[%s3 + $0xc0] sm:$0xf]
    %v186 = vld [vmem:[%s3 + $0xc4] sm:$0xf]
    %v187 = vld [vmem:[%s3 + $0xc8] sm:$0xf]
    %v188 = vld [vmem:[%s3 + $0xcc] sm:$0xf]
    %v189 = vld [vmem:[%s3 + $0xd0] sm:$0xf]
    %v190 = vld [vmem:[%s3 + $0xd4] sm:$0xf]
    %v191 = vld [vmem:[%s3 + $0xd8] sm:$0xf]
    %v192 = vld [vmem:[%s3 + $0xdc] sm:$0xf]
    %v193 = vld [vmem:[%s3 + $0xe0] sm:$0xf]
    %v194 = vld [vmem:[%s3 + $0xe4] sm:$0xf]
    %v195 = vld [vmem:[%s3 + $0xe8] sm:$0xf]
    %v196 = vld [vmem:[%s3 + $0xec] sm:$0xf]
    %v197 = vld [vmem:[%s3 + $0xf0] sm:$0xf]
    %v198 = vld [vmem:[%s3 + $0xf4] sm:$0xf]
    %v199 = vld [vmem:[%s3 + $0xf8] sm:$0xf]
    %v200 = vld [vmem:[%s3 + $0xfc] sm:$0xf]
    %v201 = vld [vmem:[%s3 + $0x100] sm:$0xf]
    %v202 = vld [vmem:[%s3 + $0x104] sm:$0xf]
    %v203 = vld [vmem:[%s3 + $0x108] sm:$0xf]
    %v204 = vld [vmem:[%s3 + $0x10c] sm:$0xf]
    %v205 = vld [vmem:[%s3 + $0x110] sm:$0xf]
    %v206 = vld [vmem:[%s3 + $0x114] sm:$0xf]
    %v207 = vld [vmem:[%s3 + $0x118] sm:$0xf]
    %v208 = vld [vmem:[%s3 + $0x11c] sm:$0xf]
    %v209 = vld [vmem:[%s3 + $0x120] sm:$0xf]
    %v210 = vld [vmem:[%s3 + $0x124] sm:$0xf]
    %v211 = vld [vmem:[%s3 + $0x128] sm:$0xf]
    %v212 = vld [vmem:[%s3 + $0x12c] sm:$0xf]
    %v213 = vld [vmem:[%s3 + $0x130] sm:$0xf]
    %v214 = vld [vmem:[%s3 + $0x134] sm:$0xf]
    %v215 = vld [vmem:[%s3 + $0x138] sm:$0xf]
    %v216 = vld [vmem:[%s3 + $0x13c] sm:$0xf]
    %v217 = vld [vmem:[%s3 + $0x140] sm:$0xf]
    %v218 = vld [vmem:[%s3 + $0x144] sm:$0xf]
    %v219 = vld [vmem:[%s3 + $0x148] sm:$0xf]
    %v220 = vld [vmem:[%s3 + $0x14c] sm:$0xf]
    %v221 = vld [vmem:[%s3 + $0x150] sm:$0xf]
    %v222 = vld [vmem:[%s3 + $0x154] sm:$0xf]
    %v223 = vld [vmem:[%s3 + $0x158] sm:$0xf]
    %v224 = vld [vmem:[%s3 + $0x15c] sm:$0xf]
    %v225 = vld [vmem:[%s3 + $0x160] sm:$0xf]
    %v226 = vld [vmem:[%s3 + $0x164] sm:$0xf]
    %v227 = vld [vmem:[%s3 + $0x168] sm:$0xf]
    %v228 = vld [vmem:[%s3 + $0x16c] sm:$0xf]
    %v229 = vld [vmem:[%s3 + $0x170] sm:$0xf]
    %v230 = vld [vmem:[%s3 + $0x174] sm:$0xf]
    %v231 = vld [vmem:[%s3 + $0x178] sm:$0xf]
    %v232 = vld [vmem:[%s3 + $0x17c] sm:$0xf]
    %v233 = vld [vmem:[%s3 + $0x180] sm:$0xf]
    %v234 = vld [vmem:[%s3 + $0x184] sm:$0xf]
    %v235 = vld [vmem:[%s3 + $0x188] sm:$0xf]
    %v236 = vld [vmem:[%s3 + $0x18c] sm:$0xf]
    %v237 = vld [vmem:[%s3 + $0x190] sm:$0xf]
    %v238 = vld [vmem:[%s3 + $0x194] sm:$0xf]
    %v239 = vld [vmem:[%s3 + $0x198] sm:$0xf]
    %v240 = vld [vmem:[%s3 + $0x19c] sm:$0xf]
    %v241 = vld [vmem:[%s3 + $0x1a0] sm:$0xf]
    %v242 = vld [vmem:[%s3 + $0x1a4] sm:$0xf]
    %v243 = vld [vmem:[%s3 + $0x1a8] sm:$0xf]
    %v244 = vld [vmem:[%s3 + $0x1ac] sm:$0xf]
    %v245 = vld [vmem:[%s3 + $0x1b0] sm:$0xf]
    %v246 = vld [vmem:[%s3 + $0x1b4] sm:$0xf]
    %v247 = vld [vmem:[%s3 + $0x1b8] sm:$0xf]
    %v248 = vld [vmem:[%s3 + $0x1bc] sm:$0xf]
    %v253 = vunpack.c.l.b16 %v21
    %v254 = vunpack.c.h.b16 %v21
    %v255 = vunpack.c.l.b16 %v22
    %v256 = vunpack.c.h.b16 %v22
    %v257 = vunpack.c.l.b16 %v23
    %v258 = vunpack.c.h.b16 %v23
    %v259 = vunpack.c.l.b16 %v24
    %v260 = vpack.c.b16 %v253, %v253
    %v261 = vpack.c.b16 %v254, %v254
    %v262 = vpack.c.b16 %v255, %v255
    %v263 = vpack.c.b16 %v256, %v256
    %v264 = vpack.c.b16 %v257, %v257
    %v265 = vpack.c.b16 %v258, %v258
    %v266 = vpack.c.b16 %v259, %v259
    %v386 = vunpack.c.l.b16 %v137
    %v387 = vunpack.c.l.b16 %v138
    %v388 = vunpack.c.l.b16 %v139
    %v389 = vunpack.c.l.b16 %v140
    %v390 = vunpack.c.l.b16 %v141
    %v391 = vunpack.c.l.b16 %v142
    %v392 = vunpack.c.l.b16 %v143
    %v393 = vunpack.c.l.b16 %v144
    %v394 = vunpack.c.l.b16 %v145
    %v395 = vunpack.c.l.b16 %v146
    %v396 = vunpack.c.l.b16 %v147
    %v397 = vunpack.c.l.b16 %v148
    %v398 = vunpack.c.l.b16 %v149
    %v399 = vunpack.c.l.b16 %v150
    %v400 = vunpack.c.l.b16 %v151
    %v401 = vunpack.c.l.b16 %v152
    %v402 = vunpack.c.l.b16 %v153
    %v403 = vunpack.c.l.b16 %v154
    %v404 = vunpack.c.l.b16 %v155
    %v405 = vunpack.c.l.b16 %v156
    %v406 = vunpack.c.l.b16 %v157
    %v407 = vunpack.c.l.b16 %v158
    %v408 = vunpack.c.l.b16 %v159
    %v409 = vunpack.c.l.b16 %v160
    %v410 = vunpack.c.l.b16 %v161
    %v411 = vunpack.c.l.b16 %v162
    %v412 = vunpack.c.l.b16 %v163
    %v413 = vunpack.c.l.b16 %v164
    %v414 = vunpack.c.l.b16 %v165
    %v415 = vunpack.c.l.b16 %v166
    %v416 = vunpack.c.l.b16 %v167
    %v417 = vunpack.c.l.b16 %v168
    %v418 = vunpack.c.l.b16 %v169
    %v419 = vunpack.c.l.b16 %v170
    %v420 = vunpack.c.l.b16 %v171
    %v421 = vunpack.c.l.b16 %v172
    %v422 = vunpack.c.l.b16 %v173
    %v423 = vunpack.c.l.b16 %v174
    %v424 = vunpack.c.l.b16 %v175
    %v425 = vunpack.c.l.b16 %v176
    %v426 = vunpack.c.l.b16 %v177
    %v427 = vunpack.c.l.b16 %v178
    %v428 = vunpack.c.l.b16 %v179
    %v429 = vunpack.c.l.b16 %v180
    %v430 = vunpack.c.l.b16 %v181
    %v431 = vunpack.c.l.b16 %v182
    %v432 = vunpack.c.l.b16 %v183
    %v433 = vunpack.c.l.b16 %v184
    %v434 = vunpack.c.l.b16 %v185
    %v435 = vunpack.c.l.b16 %v186
    %v436 = vunpack.c.l.b16 %v187
    %v437 = vunpack.c.l.b16 %v188
    %v438 = vunpack.c.l.b16 %v189
    %v439 = vunpack.c.l.b16 %v190
    %v440 = vunpack.c.l.b16 %v191
    %v441 = vunpack.c.l.b16 %v192
    %v442 = vunpack.c.l.b16 %v193
    %v443 = vunpack.c.l.b16 %v194
    %v444 = vunpack.c.l.b16 %v195
    %v445 = vunpack.c.l.b16 %v196
    %v446 = vunpack.c.l.b16 %v197
    %v447 = vunpack.c.l.b16 %v198
    %v448 = vunpack.c.l.b16 %v199
    %v449 = vunpack.c.l.b16 %v200
    %v450 = vunpack.c.l.b16 %v201
    %v451 = vunpack.c.l.b16 %v202
    %v452 = vunpack.c.l.b16 %v203
    %v453 = vunpack.c.l.b16 %v204
    %v454 = vunpack.c.l.b16 %v205
    %v455 = vunpack.c.l.b16 %v206
    %v456 = vunpack.c.l.b16 %v207
    %v457 = vunpack.c.l.b16 %v208
    %v458 = vunpack.c.l.b16 %v209
    %v459 = vunpack.c.l.b16 %v210
    %v460 = vunpack.c.l.b16 %v211
    %v461 = vunpack.c.l.b16 %v212
    %v462 = vunpack.c.l.b16 %v213
    %v463 = vunpack.c.l.b16 %v214
    %v464 = vunpack.c.l.b16 %v215
    %v465 = vunpack.c.l.b16 %v216
    %v466 = vunpack.c.l.b16 %v217
    %v467 = vunpack.c.l.b16 %v218
    %v468 = vunpack.c.l.b16 %v219
    %v469 = vunpack.c.l.b16 %v220
    %v470 = vunpack.c.l.b16 %v221
    %v471 = vunpack.c.l.b16 %v222
    %v472 = vunpack.c.l.b16 %v223
    %v473 = vunpack.c.l.b16 %v224
    %v474 = vunpack.c.l.b16 %v225
    %v475 = vunpack.c.l.b16 %v226
    %v476 = vunpack.c.l.b16 %v227
    %v477 = vunpack.c.l.b16 %v228
    %v478 = vunpack.c.l.b16 %v229
    %v479 = vunpack.c.l.b16 %v230
    %v480 = vunpack.c.l.b16 %v231
    %v481 = vunpack.c.l.b16 %v232
    %v482 = vunpack.c.l.b16 %v233
    %v483 = vunpack.c.l.b16 %v234
    %v484 = vunpack.c.l.b16 %v235
    %v485 = vunpack.c.l.b16 %v236
    %v486 = vunpack.c.l.b16 %v237
    %v487 = vunpack.c.l.b16 %v238
    %v488 = vunpack.c.l.b16 %v239
    %v489 = vunpack.c.l.b16 %v240
    %v490 = vunpack.c.l.b16 %v241
    %v491 = vunpack.c.l.b16 %v242
    %v492 = vunpack.c.l.b16 %v243
    %v493 = vunpack.c.l.b16 %v244
    %v494 = vunpack.c.l.b16 %v245
    %v495 = vunpack.c.l.b16 %v246
    %v496 = vunpack.c.l.b16 %v247
    %v497 = vunpack.c.l.b16 %v248
    %v498 = vpack.c.b16 %v387, %v386
    %v499 = vpack.c.b16 %v389, %v388
    %v500 = vpack.c.b16 %v391, %v390
    %v501 = vpack.c.b16 %v393, %v392
    %v502 = vpack.c.b16 %v395, %v394
    %v503 = vpack.c.b16 %v397, %v396
    %v504 = vpack.c.b16 %v399, %v398
    %v505 = vpack.c.b16 %v401, %v400
    %v506 = vpack.c.b16 %v403, %v402
    %v507 = vpack.c.b16 %v405, %v404
    %v508 = vpack.c.b16 %v407, %v406
    %v509 = vpack.c.b16 %v409, %v408
    %v510 = vpack.c.b16 %v411, %v410
    %v511 = vpack.c.b16 %v413, %v412
    %v512 = vpack.c.b16 %v415, %v414
    %v513 = vpack.c.b16 %v417, %v416
    %v514 = vpack.c.b16 %v419, %v418
    %v515 = vpack.c.b16 %v421, %v420
    %v516 = vpack.c.b16 %v423, %v422
    %v517 = vpack.c.b16 %v425, %v424
    %v518 = vpack.c.b16 %v427, %v426
    %v519 = vpack.c.b16 %v429, %v428
    %v520 = vpack.c.b16 %v431, %v430
    %v521 = vpack.c.b16 %v433, %v432
    %v522 = vpack.c.b16 %v435, %v434
    %v523 = vpack.c.b16 %v437, %v436
    %v524 = vpack.c.b16 %v439, %v438
    %v525 = vpack.c.b16 %v441, %v440
    %v526 = vpack.c.b16 %v443, %v442
    %v527 = vpack.c.b16 %v445, %v444
    %v528 = vpack.c.b16 %v447, %v446
    %v529 = vpack.c.b16 %v449, %v448
    %v530 = vpack.c.b16 %v451, %v450
    %v531 = vpack.c.b16 %v453, %v452
    %v532 = vpack.c.b16 %v455, %v454
    %v533 = vpack.c.b16 %v457, %v456
    %v534 = vpack.c.b16 %v459, %v458
    %v535 = vpack.c.b16 %v461, %v460
    %v536 = vpack.c.b16 %v463, %v462
    %v537 = vpack.c.b16 %v465, %v464
    %v538 = vpack.c.b16 %v467, %v466
    %v539 = vpack.c.b16 %v469, %v468
    %v540 = vpack.c.b16 %v471, %v470
    %v541 = vpack.c.b16 %v473, %v472
    %v542 = vpack.c.b16 %v475, %v474
    %v543 = vpack.c.b16 %v477, %v476
    %v544 = vpack.c.b16 %v479, %v478
    %v545 = vpack.c.b16 %v481, %v480
    %v546 = vpack.c.b16 %v483, %v482
    %v547 = vpack.c.b16 %v485, %v484
    %v548 = vpack.c.b16 %v487, %v486
    %v549 = vpack.c.b16 %v489, %v488
    %v550 = vpack.c.b16 %v491, %v490
    %v551 = vpack.c.b16 %v493, %v492
    %v552 = vpack.c.b16 %v495, %v494
    %v553 = vpack.c.b16 %v497, %v496
    %610 = vmatpush.bf16.msra.mxu0 %v505
    %611 = vmatpush.bf16.msra.mxu0 %v504
    %612 = vmatpush.bf16.msra.mxu0 %v503
    %613 = vmatpush.bf16.msra.mxu0 %v502
    %614 = vmatpush.bf16.msra.mxu0 %v501
    %615 = vmatpush.bf16.msra.mxu0 %v500
    %616 = vmatpush.bf16.msra.mxu0 %v499
    %617 = vmatpush.bf16.msra.mxu0 %v498
    %618 = vmatmul.bf16.gmra.mxu0 %v260
    %v619 = vpop.f32.mrf.mxu0
    %v620 = vadd.f32 0.0, %v619
    %v621 = vpop.f32.mrf.mxu0
    %622 = vdwg.mxu0
    %623 = vmatpush.bf16.msra.mxu0 %v513
    %624 = vmatpush.bf16.msra.mxu0 %v512
    %625 = vmatpush.bf16.msra.mxu0 %v511
    %626 = vmatpush.bf16.msra.mxu0 %v510
    %627 = vmatpush.bf16.msra.mxu0 %v509
    %628 = vmatpush.bf16.msra.mxu0 %v508
    %629 = vmatpush.bf16.msra.mxu0 %v507
    %630 = vmatpush.bf16.msra.mxu0 %v506
    %631 = vmatmul.bf16.gmra.mxu0 %v261
    %v632 = vpop.f32.mrf.mxu0
    %v633 = vadd.f32 %v620, %v632
    %v634 = vpop.f32.mrf.mxu0
    %635 = vdwg.mxu0
    %636 = vmatpush.bf16.msra.mxu0 %v521
    %637 = vmatpush.bf16.msra.mxu0 %v520
    %638 = vmatpush.bf16.msra.mxu0 %v519
    %639 = vmatpush.bf16.msra.mxu0 %v518
    %640 = vmatpush.bf16.msra.mxu0 %v517
    %641 = vmatpush.bf16.msra.mxu0 %v516
    %642 = vmatpush.bf16.msra.mxu0 %v515
    %643 = vmatpush.bf16.msra.mxu0 %v514
    %644 = vmatmul.bf16.gmra.mxu0 %v262
    %v645 = vpop.f32.mrf.mxu0
    %v646 = vadd.f32 %v633, %v645
    %v647 = vpop.f32.mrf.mxu0
    %648 = vdwg.mxu0
    %649 = vmatpush.bf16.msra.mxu0 %v529
    %650 = vmatpush.bf16.msra.mxu0 %v528
    %651 = vmatpush.bf16.msra.mxu0 %v527
    %652 = vmatpush.bf16.msra.mxu0 %v526
    %653 = vmatpush.bf16.msra.mxu0 %v525
    %654 = vmatpush.bf16.msra.mxu0 %v524
    %655 = vmatpush.bf16.msra.mxu0 %v523
    %656 = vmatpush.bf16.msra.mxu0 %v522
    %657 = vmatmul.bf16.gmra.mxu0 %v263
    %v658 = vpop.f32.mrf.mxu0
    %v659 = vadd.f32 %v646, %v658
    %v660 = vpop.f32.mrf.mxu0
    %661 = vdwg.mxu0
    %662 = vmatpush.bf16.msra.mxu0 %v537
    %663 = vmatpush.bf16.msra.mxu0 %v536
    %664 = vmatpush.bf16.msra.mxu0 %v535
    %665 = vmatpush.bf16.msra.mxu0 %v534
    %666 = vmatpush.bf16.msra.mxu0 %v533
    %667 = vmatpush.bf16.msra.mxu0 %v532
    %668 = vmatpush.bf16.msra.mxu0 %v531
    %669 = vmatpush.bf16.msra.mxu0 %v530
    %670 = vmatmul.bf16.gmra.mxu0 %v264
    %v671 = vpop.f32.mrf.mxu0
    %v672 = vadd.f32 %v659, %v671
    %v673 = vpop.f32.mrf.mxu0
    %674 = vdwg.mxu0
    %675 = vmatpush.bf16.msra.mxu0 %v545
    %676 = vmatpush.bf16.msra.mxu0 %v544
    %677 = vmatpush.bf16.msra.mxu0 %v543
    %678 = vmatpush.bf16.msra.mxu0 %v542
    %679 = vmatpush.bf16.msra.mxu0 %v541
    %680 = vmatpush.bf16.msra.mxu0 %v540
    %681 = vmatpush.bf16.msra.mxu0 %v539
    %682 = vmatpush.bf16.msra.mxu0 %v538
    %683 = vmatmul.bf16.gmra.mxu0 %v265
    %v684 = vpop.f32.mrf.mxu0
    %v685 = vadd.f32 %v672, %v684
    %v686 = vpop.f32.mrf.mxu0
    %687 = vdwg.mxu0
    %688 = vmatpush.bf16.msra.mxu0 %v553
    %689 = vmatpush.bf16.msra.mxu0 %v552
    %690 = vmatpush.bf16.msra.mxu0 %v551
    %691 = vmatpush.bf16.msra.mxu0 %v550
    %692 = vmatpush.bf16.msra.mxu0 %v549
    %693 = vmatpush.bf16.msra.mxu0 %v548
    %694 = vmatpush.bf16.msra.mxu0 %v547
    %695 = vmatpush.bf16.msra.mxu0 %v546
    %696 = vmatmul.bf16.gmra.mxu0 %v266
    %v697 = vpop.f32.mrf.mxu0
    %v698 = vadd.f32 %v685, %v697
    %v699 = vpop.f32.mrf.mxu0
    %700 = vdwg.mxu0
    %v701 = vpack.c.bf16 %v698, %v698
    %v702 = vld [vmem:[%s4] sm:$0xf]
    %v703 = vld [vmem:[%s4 + $0x4] sm:$0xf]
    %v704 = vld [vmem:[%s4 + $0x8] sm:$0xf]
    %v705 = vld [vmem:[%s4 + $0xc] sm:$0xf]
    %v706 = vld [vmem:[%s4 + $0x10] sm:$0xf]
    %v707 = vld [vmem:[%s4 + $0x14] sm:$0xf]
    %v708 = vld [vmem:[%s4 + $0x18] sm:$0xf]
    %v709 = vld [vmem:[%s4 + $0x1c] sm:$0xf]
    %v710 = vld [vmem:[%s4 + $0x20] sm:$0xf]
    %v711 = vld [vmem:[%s4 + $0x24] sm:$0xf]
    %v712 = vld [vmem:[%s4 + $0x28] sm:$0xf]
    %v713 = vld [vmem:[%s4 + $0x2c] sm:$0xf]
    %v714 = vld [vmem:[%s4 + $0x30] sm:$0xf]
    %v715 = vld [vmem:[%s4 + $0x34] sm:$0xf]
    %v716 = vld [vmem:[%s4 + $0x38] sm:$0xf]
    %v717 = vld [vmem:[%s4 + $0x3c] sm:$0xf]
    %v734 = vunpack.c.l.b16 %v702
    %v735 = vunpack.c.l.b16 %v703
    %v736 = vunpack.c.l.b16 %v704
    %v737 = vunpack.c.l.b16 %v705
    %v738 = vunpack.c.l.b16 %v706
    %v739 = vunpack.c.l.b16 %v707
    %v740 = vunpack.c.l.b16 %v708
    %v741 = vunpack.c.l.b16 %v709
    %v742 = vunpack.c.l.b16 %v710
    %v743 = vunpack.c.l.b16 %v711
    %v744 = vunpack.c.l.b16 %v712
    %v745 = vunpack.c.l.b16 %v713
    %v746 = vunpack.c.l.b16 %v714
    %v747 = vunpack.c.l.b16 %v715
    %v748 = vunpack.c.l.b16 %v716
    %v749 = vunpack.c.l.b16 %v717
    %v750 = vpack.c.b16 %v735, %v734
    %v751 = vpack.c.b16 %v737, %v736
    %v752 = vpack.c.b16 %v739, %v738
    %v753 = vpack.c.b16 %v741, %v740
    %v754 = vpack.c.b16 %v743, %v742
    %v755 = vpack.c.b16 %v745, %v744
    %v756 = vpack.c.b16 %v747, %v746
    %v757 = vpack.c.b16 %v749, %v748
    %766 = vmatpush.bf16.msra.mxu0 %v757
    %767 = vmatpush.bf16.msra.mxu0 %v756
    %768 = vmatpush.bf16.msra.mxu0 %v755
    %769 = vmatpush.bf16.msra.mxu0 %v754
    %770 = vmatpush.bf16.msra.mxu0 %v753
    %771 = vmatpush.bf16.msra.mxu0 %v752
    %772 = vmatpush.bf16.msra.mxu0 %v751
    %773 = vmatpush.bf16.msra.mxu0 %v750
    %774 = vmatmul.bf16.gmra.mxu0 %v701
    %v775 = vpop.f32.mrf.mxu0
    %v776 = vadd.f32 0.0, %v775
    %v777 = vpop.f32.mrf.mxu0
    %778 = vdwg.mxu0
    %v779 = vld [vmem:[%s2] sm:$0x1]
    %v781 = vperm.slane %v779, 0
    %v895 = vunpack.c.l.b16 %v25
    %v896 = vunpack.c.l.b16 %v26
    %v897 = vunpack.c.l.b16 %v27
    %v898 = vunpack.c.l.b16 %v28
    %v899 = vunpack.c.l.b16 %v29
    %v900 = vunpack.c.l.b16 %v30
    %v901 = vunpack.c.l.b16 %v31
    %v902 = vunpack.c.l.b16 %v32
    %v903 = vunpack.c.l.b16 %v33
    %v904 = vunpack.c.l.b16 %v34
    %v905 = vunpack.c.l.b16 %v35
    %v906 = vunpack.c.l.b16 %v36
    %v907 = vunpack.c.l.b16 %v37
    %v908 = vunpack.c.l.b16 %v38
    %v909 = vunpack.c.l.b16 %v39
    %v910 = vunpack.c.l.b16 %v40
    %v911 = vunpack.c.l.b16 %v41
    %v912 = vunpack.c.l.b16 %v42
    %v913 = vunpack.c.l.b16 %v43
    %v914 = vunpack.c.l.b16 %v44
    %v915 = vunpack.c.l.b16 %v45
    %v916 = vunpack.c.l.b16 %v46
    %v917 = vunpack.c.l.b16 %v47
    %v918 = vunpack.c.l.b16 %v48
    %v919 = vunpack.c.l.b16 %v49
    %v920 = vunpack.c.l.b16 %v50
    %v921 = vunpack.c.l.b16 %v51
    %v922 = vunpack.c.l.b16 %v52
    %v923 = vunpack.c.l.b16 %v53
    %v924 = vunpack.c.l.b16 %v54
    %v925 = vunpack.c.l.b16 %v55
    %v926 = vunpack.c.l.b16 %v56
    %v927 = vunpack.c.l.b16 %v57
    %v928 = vunpack.c.l.b16 %v58
    %v929 = vunpack.c.l.b16 %v59
    %v930 = vunpack.c.l.b16 %v60
    %v931 = vunpack.c.l.b16 %v61
    %v932 = vunpack.c.l.b16 %v62
    %v933 = vunpack.c.l.b16 %v63
    %v934 = vunpack.c.l.b16 %v64
    %v935 = vunpack.c.l.b16 %v65
    %v936 = vunpack.c.l.b16 %v66
    %v937 = vunpack.c.l.b16 %v67
    %v938 = vunpack.c.l.b16 %v68
    %v939 = vunpack.c.l.b16 %v69
    %v940 = vunpack.c.l.b16 %v70
    %v941 = vunpack.c.l.b16 %v71
    %v942 = vunpack.c.l.b16 %v72
    %v943 = vunpack.c.l.b16 %v73
    %v944 = vunpack.c.l.b16 %v74
    %v945 = vunpack.c.l.b16 %v75
    %v946 = vunpack.c.l.b16 %v76
    %v947 = vunpack.c.l.b16 %v77
    %v948 = vunpack.c.l.b16 %v78
    %v949 = vunpack.c.l.b16 %v79
    %v950 = vunpack.c.l.b16 %v80
    %v951 = vunpack.c.l.b16 %v81
    %v952 = vunpack.c.l.b16 %v82
    %v953 = vunpack.c.l.b16 %v83
    %v954 = vunpack.c.l.b16 %v84
    %v955 = vunpack.c.l.b16 %v85
    %v956 = vunpack.c.l.b16 %v86
    %v957 = vunpack.c.l.b16 %v87
    %v958 = vunpack.c.l.b16 %v88
    %v959 = vunpack.c.l.b16 %v89
    %v960 = vunpack.c.l.b16 %v90
    %v961 = vunpack.c.l.b16 %v91
    %v962 = vunpack.c.l.b16 %v92
    %v963 = vunpack.c.l.b16 %v93
    %v964 = vunpack.c.l.b16 %v94
    %v965 = vunpack.c.l.b16 %v95
    %v966 = vunpack.c.l.b16 %v96
    %v967 = vunpack.c.l.b16 %v97
    %v968 = vunpack.c.l.b16 %v98
    %v969 = vunpack.c.l.b16 %v99
    %v970 = vunpack.c.l.b16 %v100
    %v971 = vunpack.c.l.b16 %v101
    %v972 = vunpack.c.l.b16 %v102
    %v973 = vunpack.c.l.b16 %v103
    %v974 = vunpack.c.l.b16 %v104
    %v975 = vunpack.c.l.b16 %v105
    %v976 = vunpack.c.l.b16 %v106
    %v977 = vunpack.c.l.b16 %v107
    %v978 = vunpack.c.l.b16 %v108
    %v979 = vunpack.c.l.b16 %v109
    %v980 = vunpack.c.l.b16 %v110
    %v981 = vunpack.c.l.b16 %v111
    %v982 = vunpack.c.l.b16 %v112
    %v983 = vunpack.c.l.b16 %v113
    %v984 = vunpack.c.l.b16 %v114
    %v985 = vunpack.c.l.b16 %v115
    %v986 = vunpack.c.l.b16 %v116
    %v987 = vunpack.c.l.b16 %v117
    %v988 = vunpack.c.l.b16 %v118
    %v989 = vunpack.c.l.b16 %v119
    %v990 = vunpack.c.l.b16 %v120
    %v991 = vunpack.c.l.b16 %v121
    %v992 = vunpack.c.l.b16 %v122
    %v993 = vunpack.c.l.b16 %v123
    %v994 = vunpack.c.l.b16 %v124
    %v995 = vunpack.c.l.b16 %v125
    %v996 = vunpack.c.l.b16 %v126
    %v997 = vunpack.c.l.b16 %v127
    %v998 = vunpack.c.l.b16 %v128
    %v999 = vunpack.c.l.b16 %v129
    %v1000 = vunpack.c.l.b16 %v130
    %v1001 = vunpack.c.l.b16 %v131
    %v1002 = vunpack.c.l.b16 %v132
    %v1003 = vunpack.c.l.b16 %v133
    %v1004 = vunpack.c.l.b16 %v134
    %v1005 = vunpack.c.l.b16 %v135
    %v1006 = vunpack.c.l.b16 %v136
    %v1007 = vpack.c.b16 %v896, %v895
    %v1008 = vpack.c.b16 %v898, %v897
    %v1009 = vpack.c.b16 %v900, %v899
    %v1010 = vpack.c.b16 %v902, %v901
    %v1011 = vpack.c.b16 %v904, %v903
    %v1012 = vpack.c.b16 %v906, %v905
    %v1013 = vpack.c.b16 %v908, %v907
    %v1014 = vpack.c.b16 %v910, %v909
    %v1015 = vpack.c.b16 %v912, %v911
    %v1016 = vpack.c.b16 %v914, %v913
    %v1017 = vpack.c.b16 %v916, %v915
    %v1018 = vpack.c.b16 %v918, %v917
    %v1019 = vpack.c.b16 %v920, %v919
    %v1020 = vpack.c.b16 %v922, %v921
    %v1021 = vpack.c.b16 %v924, %v923
    %v1022 = vpack.c.b16 %v926, %v925
    %v1023 = vpack.c.b16 %v928, %v927
    %v1024 = vpack.c.b16 %v930, %v929
    %v1025 = vpack.c.b16 %v932, %v931
    %v1026 = vpack.c.b16 %v934, %v933
    %v1027 = vpack.c.b16 %v936, %v935
    %v1028 = vpack.c.b16 %v938, %v937
    %v1029 = vpack.c.b16 %v940, %v939
    %v1030 = vpack.c.b16 %v942, %v941
    %v1031 = vpack.c.b16 %v944, %v943
    %v1032 = vpack.c.b16 %v946, %v945
    %v1033 = vpack.c.b16 %v948, %v947
    %v1034 = vpack.c.b16 %v950, %v949
    %v1035 = vpack.c.b16 %v952, %v951
    %v1036 = vpack.c.b16 %v954, %v953
    %v1037 = vpack.c.b16 %v956, %v955
    %v1038 = vpack.c.b16 %v958, %v957
    %v1039 = vpack.c.b16 %v960, %v959
    %v1040 = vpack.c.b16 %v962, %v961
    %v1041 = vpack.c.b16 %v964, %v963
    %v1042 = vpack.c.b16 %v966, %v965
    %v1043 = vpack.c.b16 %v968, %v967
    %v1044 = vpack.c.b16 %v970, %v969
    %v1045 = vpack.c.b16 %v972, %v971
    %v1046 = vpack.c.b16 %v974, %v973
    %v1047 = vpack.c.b16 %v976, %v975
    %v1048 = vpack.c.b16 %v978, %v977
    %v1049 = vpack.c.b16 %v980, %v979
    %v1050 = vpack.c.b16 %v982, %v981
    %v1051 = vpack.c.b16 %v984, %v983
    %v1052 = vpack.c.b16 %v986, %v985
    %v1053 = vpack.c.b16 %v988, %v987
    %v1054 = vpack.c.b16 %v990, %v989
    %v1055 = vpack.c.b16 %v992, %v991
    %v1056 = vpack.c.b16 %v994, %v993
    %v1057 = vpack.c.b16 %v996, %v995
    %v1058 = vpack.c.b16 %v998, %v997
    %v1059 = vpack.c.b16 %v1000, %v999
    %v1060 = vpack.c.b16 %v1002, %v1001
    %v1061 = vpack.c.b16 %v1004, %v1003
    %v1062 = vpack.c.b16 %v1006, %v1005
    %1119 = vmatpush.bf16.msra.mxu0 %v1014
    %1120 = vmatpush.bf16.msra.mxu0 %v1013
    %1121 = vmatpush.bf16.msra.mxu0 %v1012
    %1122 = vmatpush.bf16.msra.mxu0 %v1011
    %1123 = vmatpush.bf16.msra.mxu0 %v1010
    %1124 = vmatpush.bf16.msra.mxu0 %v1009
    %1125 = vmatpush.bf16.msra.mxu0 %v1008
    %1126 = vmatpush.bf16.msra.mxu0 %v1007
    %1127 = vmatmul.bf16.gmra.mxu0 %v260
    %v1128 = vpop.f32.mrf.mxu0
    %v1129 = vadd.f32 %v781, %v1128
    %v1130 = vpop.f32.mrf.mxu0
    %1131 = vdwg.mxu0
    %1132 = vmatpush.bf16.msra.mxu0 %v1022
    %1133 = vmatpush.bf16.msra.mxu0 %v1021
    %1134 = vmatpush.bf16.msra.mxu0 %v1020
    %1135 = vmatpush.bf16.msra.mxu0 %v1019
    %1136 = vmatpush.bf16.msra.mxu0 %v1018
    %1137 = vmatpush.bf16.msra.mxu0 %v1017
    %1138 = vmatpush.bf16.msra.mxu0 %v1016
    %1139 = vmatpush.bf16.msra.mxu0 %v1015
    %1140 = vmatmul.bf16.gmra.mxu0 %v261
    %v1141 = vpop.f32.mrf.mxu0
    %v1142 = vadd.f32 %v1129, %v1141
    %v1143 = vpop.f32.mrf.mxu0
    %1144 = vdwg.mxu0
    %1145 = vmatpush.bf16.msra.mxu0 %v1030
    %1146 = vmatpush.bf16.msra.mxu0 %v1029
    %1147 = vmatpush.bf16.msra.mxu0 %v1028
    %1148 = vmatpush.bf16.msra.mxu0 %v1027
    %1149 = vmatpush.bf16.msra.mxu0 %v1026
    %1150 = vmatpush.bf16.msra.mxu0 %v1025
    %1151 = vmatpush.bf16.msra.mxu0 %v1024
    %1152 = vmatpush.bf16.msra.mxu0 %v1023
    %1153 = vmatmul.bf16.gmra.mxu0 %v262
    %v1154 = vpop.f32.mrf.mxu0
    %v1155 = vadd.f32 %v1142, %v1154
    %v1156 = vpop.f32.mrf.mxu0
    %1157 = vdwg.mxu0
    %1158 = vmatpush.bf16.msra.mxu0 %v1038
    %1159 = vmatpush.bf16.msra.mxu0 %v1037
    %1160 = vmatpush.bf16.msra.mxu0 %v1036
    %1161 = vmatpush.bf16.msra.mxu0 %v1035
    %1162 = vmatpush.bf16.msra.mxu0 %v1034
    %1163 = vmatpush.bf16.msra.mxu0 %v1033
    %1164 = vmatpush.bf16.msra.mxu0 %v1032
    %1165 = vmatpush.bf16.msra.mxu0 %v1031
    %1166 = vmatmul.bf16.gmra.mxu0 %v263
    %v1167 = vpop.f32.mrf.mxu0
    %v1168 = vadd.f32 %v1155, %v1167
    %v1169 = vpop.f32.mrf.mxu0
    %1170 = vdwg.mxu0
    %1171 = vmatpush.bf16.msra.mxu0 %v1046
    %1172 = vmatpush.bf16.msra.mxu0 %v1045
    %1173 = vmatpush.bf16.msra.mxu0 %v1044
    %1174 = vmatpush.bf16.msra.mxu0 %v1043
    %1175 = vmatpush.bf16.msra.mxu0 %v1042
    %1176 = vmatpush.bf16.msra.mxu0 %v1041
    %1177 = vmatpush.bf16.msra.mxu0 %v1040
    %1178 = vmatpush.bf16.msra.mxu0 %v1039
    %1179 = vmatmul.bf16.gmra.mxu0 %v264
    %v1180 = vpop.f32.mrf.mxu0
    %v1181 = vadd.f32 %v1168, %v1180
    %v1182 = vpop.f32.mrf.mxu0
    %1183 = vdwg.mxu0
    %1184 = vmatpush.bf16.msra.mxu0 %v1054
    %1185 = vmatpush.bf16.msra.mxu0 %v1053
    %1186 = vmatpush.bf16.msra.mxu0 %v1052
    %1187 = vmatpush.bf16.msra.mxu0 %v1051
    %1188 = vmatpush.bf16.msra.mxu0 %v1050
    %1189 = vmatpush.bf16.msra.mxu0 %v1049
    %1190 = vmatpush.bf16.msra.mxu0 %v1048
    %1191 = vmatpush.bf16.msra.mxu0 %v1047
    %1192 = vmatmul.bf16.gmra.mxu0 %v265
    %v1193 = vpop.f32.mrf.mxu0
    %v1194 = vadd.f32 %v1181, %v1193
    %v1195 = vpop.f32.mrf.mxu0
    %1196 = vdwg.mxu0
    %1197 = vmatpush.bf16.msra.mxu0 %v1062
    %1198 = vmatpush.bf16.msra.mxu0 %v1061
    %1199 = vmatpush.bf16.msra.mxu0 %v1060
    %1200 = vmatpush.bf16.msra.mxu0 %v1059
    %1201 = vmatpush.bf16.msra.mxu0 %v1058
    %1202 = vmatpush.bf16.msra.mxu0 %v1057
    %1203 = vmatpush.bf16.msra.mxu0 %v1056
    %1204 = vmatpush.bf16.msra.mxu0 %v1055
    %1205 = vmatmul.bf16.gmra.mxu0 %v266
    %v1206 = vpop.f32.mrf.mxu0
    %v1207 = vadd.f32 %v1194, %v1206
    %v1208 = vpop.f32.mrf.mxu0
    %1209 = vdwg.mxu0
    %v1210 = vmul.f32 %v776, 2.0
    %v1211 = vadd.f32 %v1207, %v1210
    %1212 = vst [vmem:[#allocation2] sm:$0xff] %v1211
    // Predicated region
    $region22: #{linear_with_lora_forward.1} parent=1 // pred_check
      _
    $region23: #{linear_with_lora_forward.1} parent=1 // pred_check_branch
      %1214 = sbr.rel (0) target = $region25
    $region24: #{linear_with_lora_forward.1} parent=1 // pred_region
      %1216 = vsyncadd [#allocation3], 0
      %s1218 = sshll.u32 [#allocation2], 4
      %s1219 = int_to_ptr.vmem [resolvable:$true] %s1218
      %s1220 = sshll.u32 %s5, 4
      %s1221 = int_to_ptr.hbm [resolvable:$true] %s1220
      %1223 = dma.vmem_to_hbm [thread:$0]  %s1219, 128, %s1221, [#allocation3]
    $region25: #{linear_with_lora_forward.1} parent=1 // pred_fallthru
      _
    // Predicated region
    $region26: #{linear_with_lora_forward.1} parent=1 // pred_check
      _
    $region27: #{linear_with_lora_forward.1} parent=1 // pred_check_branch
      %1225 = sbr.rel (0) target = $region29
    $region28: #{linear_with_lora_forward.1} parent=1 // pred_region
      %1227 = dma.done [#allocation3], 128
    $region29: #{linear_with_lora_forward.1} parent=1 // pred_fallthru
      _
    %1228 = vsyncpa [#allocation3], 1

</llo_original>
